<compile_context>
chip_gen: v7x
topology: tpu7x:2x2x1
jax: 0.10.0
libtpu: 0.0.40
codegen_flags: <defaults>
</compile_context>

<pallas_src>
import math
import jax
import jax.numpy as jnp
from jax.experimental import pallas as pl
from jax.experimental.pallas import tpu as pltpu


def _round_up(x, m):
    return ((x + m - 1) // m) * m


# ----------------------------------------------------------------------------
# Parameter init (PyTorch-style Linear init) and one-time block-diagonal packing
# ----------------------------------------------------------------------------
def init_icm_params(key, obs_size, act_size, hidden=64):
    """Deterministic PyTorch-style Linear init: U(-1/sqrt(fan_in), 1/sqrt(fan_in)).
    Weights stored [in_features, out_features] so x @ W + b == torch x @ W.T + b."""
    def linear(k, fan_in, fan_out):
        kw, kb = jax.random.split(k)
        bound = 1.0 / math.sqrt(fan_in)
        w = jax.random.uniform(kw, (fan_in, fan_out), jnp.float32, -bound, bound)
        b = jax.random.uniform(kb, (1, fan_out), jnp.float32, -bound, bound)
        return w, b

    ks = jax.random.split(key, 6)
    # Invpred_act: Linear(2*obs,64) -> Tanh -> Linear(64,64) -> Tanh -> Linear(64,act)
    w1, b1 = linear(ks[0], 2 * obs_size, hidden)
    w2, b2 = linear(ks[1], hidden, hidden)
    w3, b3 = linear(ks[2], hidden, act_size)
    # Pred_next_state: Linear(obs+act,64) -> Tanh -> Linear(64,64) -> Tanh -> Linear(64,obs)
    v1, c1 = linear(ks[3], obs_size + act_size, hidden)
    v2, c2 = linear(ks[4], hidden, hidden)
    v3, c3 = linear(ks[5], hidden, obs_size)
    return dict(w1=w1, b1=b1, w2=w2, b2=b2, w3=w3, b3=b3,
                v1=v1, c1=c1, v2=v2, c2=c2, v3=v3, c3=c3)


def pack_icm_params(p, obs, act, hidden=64, dtype=jnp.bfloat16):
    """One-time packing of the two 64-wide branches into one 128-lane block-diagonal MLP.

    Combined hidden = [inverse-branch hidden (64) | forward-branch hidden (64)] = 128 lanes.
    Output slab columns: [0:act] = pred_action, [act:act+obs] = pred_next_state, rest zero-pad.

    Weight matrices are packed in `dtype` (bf16 by default -> native MXU path); biases stay
    f32 so the bias add / tanh happen in f32 inside the kernel.
    """
    assert p["w2"].shape == (hidden, hidden) and p["v2"].shape == (hidden, hidden)
    Hc = 2 * hidden                                      # 128 combined hidden lanes
    out_w = max(128, _round_up(act + obs, 128))          # lane-dense output width
    assert act + obs <= out_w

    z = lambda r, c: jnp.zeros((r, c), jnp.float32)

    # Layer 1, split along K so the concats disappear:
    #   state      feeds both branches
    #   next_state feeds only the inverse branch (cols 0:64)
    #   action     feeds only the forward branch (cols 64:128)
    W1s = jnp.concatenate([p["w1"][:obs], p["v1"][:obs]], axis=1)                 # [obs, 128]
    W1n = jnp.concatenate([p["w1"][obs:2 * obs], z(obs, hidden)], axis=1)         # [obs, 128]
    W1a = jnp.concatenate([z(act, hidden), p["v1"][obs:obs + act]], axis=1)       # [act, 128]
    B1 = jnp.concatenate([p["b1"], p["c1"]], axis=1)                              # [1, 128]

    # Layer 2: block-diagonal 128x128
    W2 = jnp.block([[p["w2"], z(hidden, hidden)],
                    [z(hidden, hidden), p["v2"]]])                                # [128, 128]
    B2 = jnp.concatenate([p["b2"], p["c2"]], axis=1)                              # [1, 128]

    # Layer 3: block layout into the lane-dense output slab
    W3 = jnp.zeros((Hc, out_w), jnp.float32)
    W3 = W3.at[:hidden, :act].set(p["w3"])
    W3 = W3.at[hidden:, act:act + obs].set(p["v3"])                               # [128, out_w]
    B3 = jnp.zeros((1, out_w), jnp.float32)
    B3 = B3.at[:, :act].set(p["b3"])
    B3 = B3.at[:, act:act + obs].set(p["c3"])                                     # [1, out_w]

    return dict(W1s=W1s.astype(dtype), W1n=W1n.astype(dtype), W1a=W1a.astype(dtype),
                B1=B1.astype(jnp.float32),
                W2=W2.astype(dtype), B2=B2.astype(jnp.float32),
                W3=W3.astype(dtype), B3=B3.astype(jnp.float32))


# ----------------------------------------------------------------------------
# Fused forward pass
# ----------------------------------------------------------------------------
def icm_forward(state, next_state, action_params, packed, *,
                batch_tile=2048, min_grid_steps=2):
    """Pallas implementation of ICM.forward.
    Returns (real_next_state, pred_next_state, pred_action)."""
    B, obs = state.shape
    act = action_params.shape[1]
    Hc = packed["W2"].shape[0]           # 128 combined hidden lanes
    out_w = packed["W3"].shape[1]        # lane-dense output width (>= 128)
    w_dtype = packed["W2"].dtype         # compute dtype for matmul operands (bf16 or f32)

    # ---- batch tiling -------------------------------------------------------
    # * TB is always a multiple of 8 (full sublanes, no masked vregs).
    # * TB is capped at batch_tile (default 2048 rows ~= 1 MiB f32 output tile) so
    #   the ~0.35us per-grid-step overhead is amortized.
    # * When B is big enough, TB is chosen so the grid has >= min_grid_steps steps,
    #   which lets v7x shard the "parallel" batch axis across its 2 TensorCores.
    TB = min(batch_tile, max(8, _round_up(pl.cdiv(B, min_grid_steps), 8)))
    Bp = _round_up(B, TB)
    grid = (Bp // TB,)

    # Cast inputs to the matmul dtype and pad the batch.  Padded rows compute
    # garbage (tanh of biases) and are sliced off below -- never read slab[B:].
    def prep(x):
        x = x.astype(w_dtype)
        if Bp != B:
            x = jnp.pad(x, ((0, Bp - B), (0, 0)))
        return x

    state_p, next_p, actp_p = prep(state), prep(next_state), prep(action_params)

    # ---- fused kernel: one 128-lane block-diagonal MLP, concat-free first layer ----
    def kernel(s_ref, n_ref, a_ref,
               w1s_ref, w1n_ref, w1a_ref, b1_ref,
               w2_ref, b2_ref, w3_ref, b3_ref,
               o_ref):
        # Layer 1: split-K over (state | next_state | action); f32 accumulation.
        # TODO(synk): at very large TB, fold the K=4 action matmul into the
        #             next_state matmul (or a single 128-wide input slab) to save
        #             one MXU push + one (TB,128) VPU add -- measure first.
        acc = (b1_ref[...]
               + jnp.dot(s_ref[...], w1s_ref[...], preferred_element_type=jnp.float32)
               + jnp.dot(n_ref[...], w1n_ref[...], preferred_element_type=jnp.float32)
               + jnp.dot(a_ref[...], w1a_ref[...], preferred_element_type=jnp.float32))
        h = jnp.tanh(acc).astype(w_dtype)        # tanh in f32 (EUP), operand cast for MXU
        acc = b2_ref[...] + jnp.dot(h, w2_ref[...], preferred_element_type=jnp.float32)
        h = jnp.tanh(acc).astype(w_dtype)
        o = b3_ref[...] + jnp.dot(h, w3_ref[...], preferred_element_type=jnp.float32)
        # Lane-dense f32 slab; round + slicing happen in the wrapper (column-static).
        o_ref[...] = o.astype(o_ref.dtype)

    batch_spec = lambda w: pl.BlockSpec((TB, w), lambda i: (i, 0))
    # Constant index_map => weights fetched once and kept resident.
    # TODO(synk): pipeline_mode=pl.Buffered(1) on the weight specs would halve the
    #             (tiny, ~150 KiB) resident weight footprint.
    weight_spec = lambda shp: pl.BlockSpec(shp, lambda i: (0, 0))

    in_arrays = (
        state_p, next_p, actp_p,
        packed["W1s"], packed["W1n"], packed["W1a"], packed["B1"],
        packed["W2"], packed["B2"], packed["W3"], packed["B3"],
    )
    in_specs = [batch_spec(obs), batch_spec(obs), batch_spec(act)] + \
               [weight_spec(a.shape) for a in in_arrays[3:]]

    weight_bytes = int(sum(a.size * a.dtype.itemsize for a in in_arrays[3:]))
    in_bytes = int(sum(a.size * a.dtype.itemsize for a in in_arrays[:3]))
    cost = pl.CostEstimate(
        flops=int(2 * Bp * (obs * Hc + obs * Hc + act * Hc + Hc * Hc + Hc * out_w)),
        transcendentals=int(2 * Bp * Hc),
        bytes_accessed=in_bytes + weight_bytes + int(4 * Bp * out_w),
    )

    slab = pl.pallas_call(
        kernel,
        out_shape=jax.ShapeDtypeStruct((Bp, out_w), jnp.float32),
        grid=grid,
        in_specs=in_specs,
        out_specs=pl.BlockSpec((TB, out_w), lambda i: (i, 0)),
        compiler_params=pltpu.CompilerParams(
            dimension_semantics=("parallel",),      # v7x: shard batch tiles over 2 TCs
            vmem_limit_bytes=32 * 1024 * 1024,      # safe on v5e/v6e/v7x; tiles are small
        ),
        cost_estimate=cost,
    )(*in_arrays)

    # TODO(synk): for very large B, the f32 slab write is the dominant HBM traffic;
    #             emit bf16 (round applied in-kernel) or fuse the downstream loss.
    pred_action = slab[:B, :act]
    pred_next_state = jnp.round(slab[:B, act:act + obs])  # torch.round, column-static
    real_next_state = next_state
    return real_next_state, pred_next_state, pred_action


# ----------------------------------------------------------------------------
# Pure-JAX reference (unfused, concat-based — mirrors the PyTorch module exactly)
# ----------------------------------------------------------------------------
def icm_forward_ref(state, next_state, action_params, p):
    x = jnp.concatenate([state, next_state], axis=1)
    h = jnp.tanh(x @ p["w1"] + p["b1"])
    h = jnp.tanh(h @ p["w2"] + p["b2"])
    pred_act = h @ p["w3"] + p["b3"]
    y = jnp.concatenate([state, action_params], axis=1)
    g = jnp.tanh(y @ p["v1"] + p["c1"])
    g = jnp.tanh(g @ p["v2"] + p["c2"])
    pred_ns = jnp.round(g @ p["v3"] + p["c3"])
    return next_state, pred_ns, pred_act


if __name__ == "__main__":
    OBS, ACT = 16, 4
    key = jax.random.PRNGKey(0)
    k_s, k_ns, k_a, k_p = jax.random.split(key, 4)
    params = init_icm_params(k_p, OBS, ACT)

    # ------------------------------------------------------------------
    # 1) Exact-match path (f32 weights), single block (grid=(1,))
    # ------------------------------------------------------------------
    packed_f32 = pack_icm_params(params, OBS, ACT, dtype=jnp.float32)

    B = 8
    state = jax.random.normal(k_s, (B, OBS), jnp.float32)
    next_state = jax.random.normal(k_ns, (B, OBS), jnp.float32)
    action_params = jax.random.normal(k_a, (B, ACT), jnp.float32)

    real_ns, pred_ns, pred_act = icm_forward(state, next_state, action_params, packed_f32)
    jax.block_until_ready((real_ns, pred_ns, pred_act))

    ref_ns, ref_pred_ns, ref_pred_act = icm_forward_ref(state, next_state, action_params, params)
    assert jnp.allclose(real_ns, ref_ns)
    assert jnp.allclose(pred_act, ref_pred_act, atol=1e-4)
    assert jnp.allclose(pred_ns, ref_pred_ns, atol=1e-4)

    # ------------------------------------------------------------------
    # 2) Tiled/padded path (f32 weights): B=20, batch_tile=8 -> TB=8, Bp=24, grid=(3,)
    # ------------------------------------------------------------------
    B2 = 20
    k_s2, k_ns2, k_a2 = jax.random.split(jax.random.PRNGKey(1), 3)
    state2 = jax.random.normal(k_s2, (B2, OBS), jnp.float32)
    next2 = jax.random.normal(k_ns2, (B2, OBS), jnp.float32)
    actp2 = jax.random.normal(k_a2, (B2, ACT), jnp.float32)

    real2, pred_ns2, pred_act2 = icm_forward(state2, next2, actp2, packed_f32, batch_tile=8)
    jax.block_until_ready((real2, pred_ns2, pred_act2))
    r2, rns2, ract2 = icm_forward_ref(state2, next2, actp2, params)
    assert jnp.allclose(real2, r2)
    assert jnp.allclose(pred_act2, ract2, atol=1e-4)
    assert jnp.allclose(pred_ns2, rns2, atol=1e-4)

    # ------------------------------------------------------------------
    # 3) Default bf16 mixed-precision path: B=64 -> TB=32, grid=(2,) (>=2 steps for v7x)
    # ------------------------------------------------------------------
    packed_bf16 = pack_icm_params(params, OBS, ACT)   # default dtype = bf16
    B3 = 64
    k_s3, k_ns3, k_a3 = jax.random.split(jax.random.PRNGKey(2), 3)
    state3 = jax.random.normal(k_s3, (B3, OBS), jnp.float32)
    next3 = jax.random.normal(k_ns3, (B3, OBS), jnp.float32)
    actp3 = jax.random.normal(k_a3, (B3, ACT), jnp.float32)

    real3, pred_ns3, pred_act3 = icm_forward(state3, next3, actp3, packed_bf16)
    jax.block_until_ready((real3, pred_ns3, pred_act3))
    r3, rns3, ract3 = icm_forward_ref(state3, next3, actp3, params)
    assert jnp.allclose(real3, r3)
    # bf16 operands, f32 accumulation: loose tolerance; round may flip by at most 1.
    assert jnp.allclose(pred_act3, ract3, atol=1e-1)
    assert float(jnp.max(jnp.abs(pred_ns3 - rns3))) <= 1.0 + 1e-6

    print("KERNEL_OK")
</pallas_src>

<mosaic_0001>
module attributes {stable_mosaic.version = 11 : i64} {
  func.func @kernel(%arg0: i32, %arg1: memref<8x16xf32, #tpu.memory_space<vmem>>, %arg2: memref<8x16xf32, #tpu.memory_space<vmem>>, %arg3: memref<8x4xf32, #tpu.memory_space<vmem>>, %arg4: memref<16x128xf32, #tpu.memory_space<vmem>>, %arg5: memref<16x128xf32, #tpu.memory_space<vmem>>, %arg6: memref<4x128xf32, #tpu.memory_space<vmem>>, %arg7: memref<1x128xf32, #tpu.memory_space<vmem>>, %arg8: memref<128x128xf32, #tpu.memory_space<vmem>>, %arg9: memref<1x128xf32, #tpu.memory_space<vmem>>, %arg10: memref<128x128xf32, #tpu.memory_space<vmem>>, %arg11: memref<1x128xf32, #tpu.memory_space<vmem>>, %arg12: memref<8x128xf32, #tpu.memory_space<vmem>>) attributes {dimension_semantics = [#tpu.dimension_semantics<parallel>], iteration_bounds = array<i64: 1>, scalar_prefetch = 0 : i64, scratch_operands = 0 : i64, tpu.core_type = #tpu.core_type<tc>, window_params = [{transform_indices = @transform_0, window_bounds = array<i64: 8, 16>}, {transform_indices = @transform_1, window_bounds = array<i64: 8, 16>}, {transform_indices = @transform_2, window_bounds = array<i64: 8, 4>}, {pipeline_mode = #tpu.pipeline_mode<synchronous>, transform_indices = @transform_3, window_bounds = array<i64: 16, 128>}, {pipeline_mode = #tpu.pipeline_mode<synchronous>, transform_indices = @transform_4, window_bounds = array<i64: 16, 128>}, {pipeline_mode = #tpu.pipeline_mode<synchronous>, transform_indices = @transform_5, window_bounds = array<i64: 4, 128>}, {pipeline_mode = #tpu.pipeline_mode<synchronous>, transform_indices = @transform_6, window_bounds = array<i64: 1, 128>}, {pipeline_mode = #tpu.pipeline_mode<synchronous>, transform_indices = @transform_7, window_bounds = array<i64: 128, 128>}, {pipeline_mode = #tpu.pipeline_mode<synchronous>, transform_indices = @transform_8, window_bounds = array<i64: 1, 128>}, {pipeline_mode = #tpu.pipeline_mode<synchronous>, transform_indices = @transform_9, window_bounds = array<i64: 128, 128>}, {pipeline_mode = #tpu.pipeline_mode<synchronous>, transform_indices = @transform_10, window_bounds = array<i64: 1, 128>}, {transform_indices = @transform_11, window_bounds = array<i64: 8, 128>}]} {
    %c0 = arith.constant 0 : index
    %c0_0 = arith.constant 0 : index
    %0 = vector.load %arg7[%c0, %c0_0] : memref<1x128xf32, #tpu.memory_space<vmem>>, vector<1x128xf32>
    %c0_1 = arith.constant 0 : index
    %c0_2 = arith.constant 0 : index
    %1 = vector.load %arg1[%c0_1, %c0_2] : memref<8x16xf32, #tpu.memory_space<vmem>>, vector<8x16xf32>
    %c0_3 = arith.constant 0 : index
    %c0_4 = arith.constant 0 : index
    %2 = vector.load %arg4[%c0_3, %c0_4] : memref<16x128xf32, #tpu.memory_space<vmem>>, vector<16x128xf32>
    %cst = arith.constant dense<0.000000e+00> : vector<8x128xf32>
    %3 = tpu.matmul %1, %2, %cst {dimension_numbers = #tpu.dot_dimension_numbers<[1], [0], [0], [1], [0, 0, 1, 1], [], []>} : vector<8x16xf32>, vector<16x128xf32>, vector<8x128xf32> -> vector<8x128xf32>
    %4 = vector.broadcast %0 : vector<1x128xf32> to vector<8x128xf32>
    %5 = arith.addf %4, %3 : vector<8x128xf32>
    %c0_5 = arith.constant 0 : index
    %c0_6 = arith.constant 0 : index
    %6 = vector.load %arg2[%c0_5, %c0_6] : memref<8x16xf32, #tpu.memory_space<vmem>>, vector<8x16xf32>
    %c0_7 = arith.constant 0 : index
    %c0_8 = arith.constant 0 : index
    %7 = vector.load %arg5[%c0_7, %c0_8] : memref<16x128xf32, #tpu.memory_space<vmem>>, vector<16x128xf32>
    %cst_9 = arith.constant dense<0.000000e+00> : vector<8x128xf32>
    %8 = tpu.matmul %6, %7, %cst_9 {dimension_numbers = #tpu.dot_dimension_numbers<[1], [0], [0], [1], [0, 0, 1, 1], [], []>} : vector<8x16xf32>, vector<16x128xf32>, vector<8x128xf32> -> vector<8x128xf32>
    %9 = arith.addf %5, %8 : vector<8x128xf32>
    %c0_10 = arith.constant 0 : index
    %c0_11 = arith.constant 0 : index
    %10 = vector.load %arg3[%c0_10, %c0_11] : memref<8x4xf32, #tpu.memory_space<vmem>>, vector<8x4xf32>
    %c0_12 = arith.constant 0 : index
    %c0_13 = arith.constant 0 : index
    %11 = vector.load %arg6[%c0_12, %c0_13] : memref<4x128xf32, #tpu.memory_space<vmem>>, vector<4x128xf32>
    %cst_14 = arith.constant dense<0.000000e+00> : vector<8x128xf32>
    %12 = tpu.matmul %10, %11, %cst_14 {dimension_numbers = #tpu.dot_dimension_numbers<[1], [0], [0], [1], [0, 0, 1, 1], [], []>} : vector<8x4xf32>, vector<4x128xf32>, vector<8x128xf32> -> vector<8x128xf32>
    %13 = arith.addf %9, %12 : vector<8x128xf32>
    %14 = math.tanh %13 : vector<8x128xf32>
    %c0_15 = arith.constant 0 : index
    %c0_16 = arith.constant 0 : index
    %15 = vector.load %arg9[%c0_15, %c0_16] : memref<1x128xf32, #tpu.memory_space<vmem>>, vector<1x128xf32>
    %c0_17 = arith.constant 0 : index
    %c0_18 = arith.constant 0 : index
    %16 = vector.load %arg8[%c0_17, %c0_18] : memref<128x128xf32, #tpu.memory_space<vmem>>, vector<128x128xf32>
    %cst_19 = arith.constant dense<0.000000e+00> : vector<8x128xf32>
    %17 = tpu.matmul %14, %16, %cst_19 {dimension_numbers = #tpu.dot_dimension_numbers<[1], [0], [0], [1], [0, 0, 1, 1], [], []>} : vector<8x128xf32>, vector<128x128xf32>, vector<8x128xf32> -> vector<8x128xf32>
    %18 = vector.broadcast %15 : vector<1x128xf32> to vector<8x128xf32>
    %19 = arith.addf %18, %17 : vector<8x128xf32>
    %20 = math.tanh %19 : vector<8x128xf32>
    %c0_20 = arith.constant 0 : index
    %c0_21 = arith.constant 0 : index
    %21 = vector.load %arg11[%c0_20, %c0_21] : memref<1x128xf32, #tpu.memory_space<vmem>>, vector<1x128xf32>
    %c0_22 = arith.constant 0 : index
    %c0_23 = arith.constant 0 : index
    %22 = vector.load %arg10[%c0_22, %c0_23] : memref<128x128xf32, #tpu.memory_space<vmem>>, vector<128x128xf32>
    %cst_24 = arith.constant dense<0.000000e+00> : vector<8x128xf32>
    %23 = tpu.matmul %20, %22, %cst_24 {dimension_numbers = #tpu.dot_dimension_numbers<[1], [0], [0], [1], [0, 0, 1, 1], [], []>} : vector<8x128xf32>, vector<128x128xf32>, vector<8x128xf32> -> vector<8x128xf32>
    %24 = vector.broadcast %21 : vector<1x128xf32> to vector<8x128xf32>
    %25 = arith.addf %24, %23 : vector<8x128xf32>
    %c0_25 = arith.constant 0 : index
    %c0_26 = arith.constant 0 : index
    %26 = vector.load %arg12[%c0_25, %c0_26] : memref<8x128xf32, #tpu.memory_space<vmem>>, vector<8x128xf32>
    tpu.vector_store %arg12[%c0_25, %c0_26], %25 {strides = array<i32>} : memref<8x128xf32, #tpu.memory_space<vmem>>, vector<8x128xf32>,
    return
  }
  func.func @transform_0(%arg0: i32) -> (i32, i32) {
    %c0_i32 = arith.constant 0 : i32
    %c0_i32_0 = arith.constant 0 : i32
    return %arg0, %c0_i32 : i32, i32
  }
  func.func @transform_1(%arg0: i32) -> (i32, i32) {
    %c0_i32 = arith.constant 0 : i32
    %c0_i32_0 = arith.constant 0 : i32
    return %arg0, %c0_i32 : i32, i32
  }
  func.func @transform_2(%arg0: i32) -> (i32, i32) {
    %c0_i32 = arith.constant 0 : i32
    %c0_i32_0 = arith.constant 0 : i32
    return %arg0, %c0_i32 : i32, i32
  }
  func.func @transform_3(%arg0: i32) -> (i32, i32) {
    %c0_i32 = arith.constant 0 : i32
    %c0_i32_0 = arith.constant 0 : i32
    %c0_i32_1 = arith.constant 0 : i32
    return %c0_i32, %c0_i32_0 : i32, i32
  }
  func.func @transform_4(%arg0: i32) -> (i32, i32) {
    %c0_i32 = arith.constant 0 : i32
    %c0_i32_0 = arith.constant 0 : i32
    %c0_i32_1 = arith.constant 0 : i32
    return %c0_i32, %c0_i32_0 : i32, i32
  }
  func.func @transform_5(%arg0: i32) -> (i32, i32) {
    %c0_i32 = arith.constant 0 : i32
    %c0_i32_0 = arith.constant 0 : i32
    %c0_i32_1 = arith.constant 0 : i32
    return %c0_i32, %c0_i32_0 : i32, i32
  }
  func.func @transform_6(%arg0: i32) -> (i32, i32) {
    %c0_i32 = arith.constant 0 : i32
    %c0_i32_0 = arith.constant 0 : i32
    %c0_i32_1 = arith.constant 0 : i32
    return %c0_i32, %c0_i32_0 : i32, i32
  }
  func.func @transform_7(%arg0: i32) -> (i32, i32) {
    %c0_i32 = arith.constant 0 : i32
    %c0_i32_0 = arith.constant 0 : i32
    %c0_i32_1 = arith.constant 0 : i32
    return %c0_i32, %c0_i32_0 : i32, i32
  }
  func.func @transform_8(%arg0: i32) -> (i32, i32) {
    %c0_i32 = arith.constant 0 : i32
    %c0_i32_0 = arith.constant 0 : i32
    %c0_i32_1 = arith.constant 0 : i32
    return %c0_i32, %c0_i32_0 : i32, i32
  }
  func.func @transform_9(%arg0: i32) -> (i32, i32) {
    %c0_i32 = arith.constant 0 : i32
    %c0_i32_0 = arith.constant 0 : i32
    %c0_i32_1 = arith.constant 0 : i32
    return %c0_i32, %c0_i32_0 : i32, i32
  }
  func.func @transform_10(%arg0: i32) -> (i32, i32) {
    %c0_i32 = arith.constant 0 : i32
    %c0_i32_0 = arith.constant 0 : i32
    %c0_i32_1 = arith.constant 0 : i32
    return %c0_i32, %c0_i32_0 : i32, i32
  }
  func.func @transform_11(%arg0: i32) -> (i32, i32) {
    %c0_i32 = arith.constant 0 : i32
    %c0_i32_0 = arith.constant 0 : i32
    return %arg0, %c0_i32 : i32, i32
  }
}

</mosaic_0001>

<llo_original>
// kernel: tpu_custom_call.1
$region0: #{tpu_custom_call.1}
  #allocation0 [shape = 'u32[]', space=smem, size = 0x4, offset = 0x4, fixed_abs, tag = 'smem constant byte address 0x4 - core index']
  #allocation1 [shape = 'u32[144,128]{1,0:T(1,128)}', space=vmem, size = 0x12000, scoped, tag = 'internal scratch']
  %s0 = inlined_call_operand.hbm [shape: f32[8,16], index: 0, kind: input, shape index: {}]
  %s1 = inlined_call_operand.hbm [shape: f32[8,16], index: 1, kind: input, shape index: {}]
  %s2 = inlined_call_operand.vmem [shape: f32[8,4], index: 2, kind: input, shape index: {}]
  %s3 = inlined_call_operand.vmem [shape: f32[16,128], index: 3, kind: input, shape index: {}]
  %s4 = inlined_call_operand.hbm [shape: f32[16,128], index: 4, kind: input, shape index: {}]
  %s5 = inlined_call_operand.vmem [shape: f32[4,128], index: 5, kind: input, shape index: {}]
  %s6 = inlined_call_operand.vmem [shape: f32[1,128], index: 6, kind: input, shape index: {}]
  %s7 = inlined_call_operand.hbm [shape: f32[128,128], index: 7, kind: input, shape index: {}]
  %s8 = inlined_call_operand.vmem [shape: f32[1,128], index: 8, kind: input, shape index: {}]
  %s9 = inlined_call_operand.hbm [shape: f32[128,128], index: 9, kind: input, shape index: {}]
  %s10 = inlined_call_operand.vmem [shape: f32[1,128], index: 10, kind: input, shape index: {}]
  %s11 = inlined_call_operand.hbm [shape: f32[8,128], index: 11, kind: output, shape index: {}]
  %s12 = sld [smem:[#allocation0]]
  $region74: #{tpu_custom_call.1} parent=0
    _
  %s14 = ssub.s32 1, %s12
  %s15 = scalar_select 0, %s14, %s12
  $region1: #{tpu_custom_call.1} parent=0
    #allocation2 [shape = 'u8[4096]{0}', space=vmem, size = 0x1000, scoped, tag = 'input window, operand 0, single buffered']
    #allocation3 [shape = 's32[1]{0}', space=sflag, size = 0x4, scoped, tag = 'scoped memory for tpu_custom_call.1']
    #allocation4 [shape = 's32[1]{0}', space=sflag, size = 0x4, scoped, tag = 'scoped memory for tpu_custom_call.1']
    #allocation5 [shape = 'u8[4096]{0}', space=vmem, size = 0x1000, scoped, tag = 'input window, operand 1, single buffered']
    #allocation6 [shape = 's32[1]{0}', space=sflag, size = 0x4, scoped, tag = 'scoped memory for tpu_custom_call.1']
    #allocation7 [shape = 'u8[8192]{0}', space=vmem, size = 0x2000, scoped, tag = 'input window, operand 4, single buffered']
    #allocation8 [shape = 'u8[65536]{0}', space=vmem, size = 0x10000, scoped, tag = 'input window, operand 7, single buffered']
    #allocation9 [shape = 's32[1]{0}', space=sflag, size = 0x4, scoped, tag = 'scoped memory for tpu_custom_call.1']
    #allocation10 [shape = 'u8[65536]{0}', space=vmem, size = 0x10000, scoped, tag = 'input window, operand 9, single buffered']
    #allocation11 [shape = 'u8[4096]{0}', space=vmem, size = 0x1000, scoped, tag = 'output window, operand 0, single buffered']
    %16 = vsyncpa [#allocation3], 0
    %17 = vsyncpa [#allocation6], 0
    %18 = vsyncpa [#allocation9], 0
    %19 = vsyncpa [#allocation4], 0
    // Predicated region
    $region2: #{tpu_custom_call.1} parent=1 // pred_check
      _
    $region3: #{tpu_custom_call.1} parent=1 // pred_check_branch
      %21 = sbr.rel (0) target = $region5
    $region4: #{tpu_custom_call.1} parent=1 // pred_region
      %s23 = ssub.s32 128, 128
      %24 = vsyncadd [#allocation3], %s23
      %s26 = sshll.u32 [#allocation2], 4
      %s27 = int_to_ptr.vmem [resolvable:$true] %s26
      %29 = dma.hbm_to_vmem [thread:$0]  %s0, 128, %s27, [#allocation3]
    $region5: #{tpu_custom_call.1} parent=1 // pred_fallthru
      _
    // Predicated region
    $region6: #{tpu_custom_call.1} parent=1 // pred_check
      _
    $region7: #{tpu_custom_call.1} parent=1 // pred_check_branch
      %31 = sbr.rel (0) target = $region9
    $region8: #{tpu_custom_call.1} parent=1 // pred_region
      %s33 = ssub.s32 128, 128
      %34 = vsyncadd [#allocation6], %s33
      %s36 = sshll.u32 [#allocation5], 4
      %s37 = int_to_ptr.vmem [resolvable:$true] %s36
      %39 = dma.hbm_to_vmem [thread:$0]  %s1, 128, %s37, [#allocation6]
    $region9: #{tpu_custom_call.1} parent=1 // pred_fallthru
      _
    // Predicated region
    $region10: #{tpu_custom_call.1} parent=1 // pred_check
      _
    $region11: #{tpu_custom_call.1} parent=1 // pred_check_branch
      %41 = sbr.rel (0) target = $region13
    $region12: #{tpu_custom_call.1} parent=1 // pred_region
      _
    $region13: #{tpu_custom_call.1} parent=1 // pred_fallthru
      _
    // Predicated region
    $region14: #{tpu_custom_call.1} parent=1 // pred_check
      _
    $region15: #{tpu_custom_call.1} parent=1 // pred_check_branch
      %43 = sbr.rel (0) target = $region17
    $region16: #{tpu_custom_call.1} parent=1 // pred_region
      _
    $region17: #{tpu_custom_call.1} parent=1 // pred_fallthru
      _
    // Predicated region
    $region18: #{tpu_custom_call.1} parent=1 // pred_check
      _
    $region19: #{tpu_custom_call.1} parent=1 // pred_check_branch
      %45 = sbr.rel (0) target = $region21
    $region20: #{tpu_custom_call.1} parent=1 // pred_region
      %s47 = ssub.s32 256, 256
      %48 = vsyncadd [#allocation6], %s47
      %s49 = sshll.u32 [#allocation7], 4
      %s50 = int_to_ptr.vmem [resolvable:$true] %s49
      %55 = dma.hbm_to_vmem [thread:$0]  %s4, 256, %s50, [#allocation6], 128, 128, 8
    $region21: #{tpu_custom_call.1} parent=1 // pred_fallthru
      _
    // Predicated region
    $region22: #{tpu_custom_call.1} parent=1 // pred_check
      _
    $region23: #{tpu_custom_call.1} parent=1 // pred_check_branch
      %57 = sbr.rel (0) target = $region25
    $region24: #{tpu_custom_call.1} parent=1 // pred_region
      _
    $region25: #{tpu_custom_call.1} parent=1 // pred_fallthru
      _
    // Predicated region
    $region26: #{tpu_custom_call.1} parent=1 // pred_check
      _
    $region27: #{tpu_custom_call.1} parent=1 // pred_check_branch
      %59 = sbr.rel (0) target = $region29
    $region28: #{tpu_custom_call.1} parent=1 // pred_region
      _
    $region29: #{tpu_custom_call.1} parent=1 // pred_fallthru
      _
    // Predicated region
    $region30: #{tpu_custom_call.1} parent=1 // pred_check
      _
    $region31: #{tpu_custom_call.1} parent=1 // pred_check_branch
      %61 = sbr.rel (0) target = $region33
    $region32: #{tpu_custom_call.1} parent=1 // pred_region
      %s63 = ssub.s32 2048, 2048
      %64 = vsyncadd [#allocation9], %s63
      %s65 = sshll.u32 [#allocation8], 4
      %s66 = int_to_ptr.vmem [resolvable:$true] %s65
      %71 = dma.hbm_to_vmem [thread:$0]  %s7, 2048, %s66, [#allocation9], 128, 128, 8
    $region33: #{tpu_custom_call.1} parent=1 // pred_fallthru
      _
    // Predicated region
    $region34: #{tpu_custom_call.1} parent=1 // pred_check
      _
    $region35: #{tpu_custom_call.1} parent=1 // pred_check_branch
      %73 = sbr.rel (0) target = $region37
    $region36: #{tpu_custom_call.1} parent=1 // pred_region
      _
    $region37: #{tpu_custom_call.1} parent=1 // pred_fallthru
      _
    // Predicated region
    $region38: #{tpu_custom_call.1} parent=1 // pred_check
      _
    $region39: #{tpu_custom_call.1} parent=1 // pred_check_branch
      %75 = sbr.rel (0) target = $region41
    $region40: #{tpu_custom_call.1} parent=1 // pred_region
      %s77 = ssub.s32 2048, 2048
      %78 = vsyncadd [#allocation9], %s77
      %s79 = sshll.u32 [#allocation10], 4
      %s80 = int_to_ptr.vmem [resolvable:$true] %s79
      %85 = dma.hbm_to_vmem [thread:$0]  %s9, 2048, %s80, [#allocation9], 128, 128, 8
    $region41: #{tpu_custom_call.1} parent=1 // pred_fallthru
      _
    // Predicated region
    $region42: #{tpu_custom_call.1} parent=1 // pred_check
      _
    $region43: #{tpu_custom_call.1} parent=1 // pred_check_branch
      %87 = sbr.rel (0) target = $region45
    $region44: #{tpu_custom_call.1} parent=1 // pred_region
      _
    $region45: #{tpu_custom_call.1} parent=1 // pred_fallthru
      _
    // Predicated region
    $region46: #{tpu_custom_call.1} parent=1 // pred_check
      _
    $region47: #{tpu_custom_call.1} parent=1 // pred_check_branch
      %89 = sbr.rel (0) target = $region49
    $region48: #{tpu_custom_call.1} parent=1 // pred_region
      %90 = dma.done [#allocation3], 128
    $region49: #{tpu_custom_call.1} parent=1 // pred_fallthru
      _
    // Predicated region
    $region50: #{tpu_custom_call.1} parent=1 // pred_check
      _
    $region51: #{tpu_custom_call.1} parent=1 // pred_check_branch
      %92 = sbr.rel (0) target = $region53
    $region52: #{tpu_custom_call.1} parent=1 // pred_region
      %93 = dma.done [#allocation6], 128
    $region53: #{tpu_custom_call.1} parent=1 // pred_fallthru
      _
    // Predicated region
    $region54: #{tpu_custom_call.1} parent=1 // pred_check
      _
    $region55: #{tpu_custom_call.1} parent=1 // pred_check_branch
      %95 = sbr.rel (0) target = $region57
    $region56: #{tpu_custom_call.1} parent=1 // pred_region
      %96 = dma.done [#allocation6], 256
    $region57: #{tpu_custom_call.1} parent=1 // pred_fallthru
      _
    // Predicated region
    $region58: #{tpu_custom_call.1} parent=1 // pred_check
      _
    $region59: #{tpu_custom_call.1} parent=1 // pred_check_branch
      %98 = sbr.rel (0) target = $region61
    $region60: #{tpu_custom_call.1} parent=1 // pred_region
      %99 = dma.done [#allocation9], 2048
    $region61: #{tpu_custom_call.1} parent=1 // pred_fallthru
      _
    // Predicated region
    $region62: #{tpu_custom_call.1} parent=1 // pred_check
      _
    $region63: #{tpu_custom_call.1} parent=1 // pred_check_branch
      %101 = sbr.rel (0) target = $region65
    $region64: #{tpu_custom_call.1} parent=1 // pred_region
      %102 = dma.done [#allocation9], 2048
    $region65: #{tpu_custom_call.1} parent=1 // pred_fallthru
      _
    %v103 = vld [vmem:[%s6] sm:$0x1]
    %v104 = vld [vmem:[#allocation2] sm:$0xff]
    %v105 = vld [vmem:[%s3] sm:$0xff]
    %v106 = vld [vmem:[%s3 + $0x8] sm:$0xff]
    %vm107 = vcmask 130048
    %v109 = vsel %vm107, %v104, 0
    %111 = vmatprep.subr.mxu0 0.0
    %112 = vmatpush1.msra.mxu0 %v105
    %113 = vmatprep.subr.mxu0 0.0
    %114 = vmatpush1.msra.mxu0 %v106
    %115 = vmatprep.subr.mxu0 0.0
    %116 = vmatpush1.msra.mxu0 0.0
    %117 = vmatprep.subr.mxu0 0.0
    %118 = vmatpush1.msra.mxu0 0.0
    %119 = vmatprep.subr.mxu0 0.0
    %120 = vmatpush1.msra.mxu0 0.0
    %121 = vmatprep.subr.mxu0 0.0
    %122 = vmatpush1.msra.mxu0 0.0
    %123 = vmatprep.subr.mxu0 0.0
    %124 = vmatpush1.msra.mxu0 0.0
    %125 = vmatprep.subr.mxu0 0.0
    %126 = vmatpush1.msra.mxu0 0.0
    %127 = vmatprep.subr.mxu0 0.0
    %128 = vmatpush1.msra.mxu0 0.0
    %129 = vmatprep.subr.mxu0 0.0
    %130 = vmatpush1.msra.mxu0 0.0
    %131 = vmatprep.subr.mxu0 0.0
    %132 = vmatpush1.msra.mxu0 0.0
    %133 = vmatprep.subr.mxu0 0.0
    %134 = vmatpush1.msra.mxu0 0.0
    %135 = vmatprep.subr.mxu0 0.0
    %136 = vmatpush1.msra.mxu0 0.0
    %137 = vmatprep.subr.mxu0 0.0
    %138 = vmatpush1.msra.mxu0 0.0
    %139 = vmatprep.subr.mxu0 0.0
    %140 = vmatpush1.msra.mxu0 0.0
    %141 = vmatprep.subr.mxu0 0.0
    %142 = vmatpush1.msra.mxu0 0.0
    %143 = vmatprep.subr.mxu0 0.0
    %144 = vmatpush1.msra.mxu0 0.0
    %145 = vmatprep.subr.mxu0 0.0
    %146 = vmatpush1.msra.mxu0 0.0
    %147 = vmatprep.subr.mxu0 0.0
    %148 = vmatpush1.msra.mxu0 0.0
    %149 = vmatprep.subr.mxu0 0.0
    %150 = vmatpush1.msra.mxu0 0.0
    %151 = vmatprep.subr.mxu0 0.0
    %152 = vmatpush1.msra.mxu0 0.0
    %153 = vmatprep.subr.mxu0 0.0
    %154 = vmatpush1.msra.mxu0 0.0
    %155 = vmatprep.subr.mxu0 0.0
    %156 = vmatpush1.msra.mxu0 0.0
    %157 = vmatprep.subr.mxu0 0.0
    %158 = vmatpush1.msra.mxu0 0.0
    %159 = vmatprep.subr.mxu0 0.0
    %160 = vmatpush1.msra.mxu0 0.0
    %161 = vmatprep.subr.mxu0 0.0
    %162 = vmatpush1.msra.mxu0 0.0
    %163 = vmatprep.subr.mxu0 0.0
    %164 = vmatpush1.msra.mxu0 0.0
    %165 = vmatprep.subr.mxu0 0.0
    %166 = vmatpush1.msra.mxu0 0.0
    %167 = vmatprep.subr.mxu0 0.0
    %168 = vmatpush1.msra.mxu0 0.0
    %169 = vmatprep.subr.mxu0 0.0
    %170 = vmatpush1.msra.mxu0 0.0
    %171 = vmatprep.subr.mxu0 0.0
    %172 = vmatpush1.msra.mxu0 0.0
    %173 = vmatprep.subr.mxu0 0.0
    %174 = vmatpush1.msra.mxu0 0.0
    %175 = vmatprep.mubr.f32.mxu0 0.0
    %176 = vmatmul.mubr.f32.gmra.mrb[0].mxu0 %v109
    %v177 = vpop.f32.mrb[0].mxu0
    %v178 = vadd.f32 0.0, %v177
    %v179 = vpop.f32.mrb[0].mxu0
    %180 = vdwg.mxu0
    %v182 = vlaneseq
    %v183 = vshrl.u32 %v182, 7
    %v184 = vsub.s32 0, %v183
    %v185 = vrot.slane %v103, %v184
    %v187 = vadd.f32 %v185, %v178
    %v188 = vld [vmem:[#allocation5] sm:$0xff]
    %v189 = vld [vmem:[#allocation7] sm:$0xff]
    %v190 = vld [vmem:[#allocation7 + $0x8] sm:$0xff]
    %v192 = vsel %vm107, %v188, 0
    %194 = vmatprep.subr.mxu0 0.0
    %195 = vmatpush1.msra.mxu0 %v189
    %196 = vmatprep.subr.mxu0 0.0
    %197 = vmatpush1.msra.mxu0 %v190
    %198 = vmatprep.subr.mxu0 0.0
    %199 = vmatpush1.msra.mxu0 0.0
    %200 = vmatprep.subr.mxu0 0.0
    %201 = vmatpush1.msra.mxu0 0.0
    %202 = vmatprep.subr.mxu0 0.0
    %203 = vmatpush1.msra.mxu0 0.0
    %204 = vmatprep.subr.mxu0 0.0
    %205 = vmatpush1.msra.mxu0 0.0
    %206 = vmatprep.subr.mxu0 0.0
    %207 = vmatpush1.msra.mxu0 0.0
    %208 = vmatprep.subr.mxu0 0.0
    %209 = vmatpush1.msra.mxu0 0.0
    %210 = vmatprep.subr.mxu0 0.0
    %211 = vmatpush1.msra.mxu0 0.0
    %212 = vmatprep.subr.mxu0 0.0
    %213 = vmatpush1.msra.mxu0 0.0
    %214 = vmatprep.subr.mxu0 0.0
    %215 = vmatpush1.msra.mxu0 0.0
    %216 = vmatprep.subr.mxu0 0.0
    %217 = vmatpush1.msra.mxu0 0.0
    %218 = vmatprep.subr.mxu0 0.0
    %219 = vmatpush1.msra.mxu0 0.0
    %220 = vmatprep.subr.mxu0 0.0
    %221 = vmatpush1.msra.mxu0 0.0
    %222 = vmatprep.subr.mxu0 0.0
    %223 = vmatpush1.msra.mxu0 0.0
    %224 = vmatprep.subr.mxu0 0.0
    %225 = vmatpush1.msra.mxu0 0.0
    %226 = vmatprep.subr.mxu0 0.0
    %227 = vmatpush1.msra.mxu0 0.0
    %228 = vmatprep.subr.mxu0 0.0
    %229 = vmatpush1.msra.mxu0 0.0
    %230 = vmatprep.subr.mxu0 0.0
    %231 = vmatpush1.msra.mxu0 0.0
    %232 = vmatprep.subr.mxu0 0.0
    %233 = vmatpush1.msra.mxu0 0.0
    %234 = vmatprep.subr.mxu0 0.0
    %235 = vmatpush1.msra.mxu0 0.0
    %236 = vmatprep.subr.mxu0 0.0
    %237 = vmatpush1.msra.mxu0 0.0
    %238 = vmatprep.subr.mxu0 0.0
    %239 = vmatpush1.msra.mxu0 0.0
    %240 = vmatprep.subr.mxu0 0.0
    %241 = vmatpush1.msra.mxu0 0.0
    %242 = vmatprep.subr.mxu0 0.0
    %243 = vmatpush1.msra.mxu0 0.0
    %244 = vmatprep.subr.mxu0 0.0
    %245 = vmatpush1.msra.mxu0 0.0
    %246 = vmatprep.subr.mxu0 0.0
    %247 = vmatpush1.msra.mxu0 0.0
    %248 = vmatprep.subr.mxu0 0.0
    %249 = vmatpush1.msra.mxu0 0.0
    %250 = vmatprep.subr.mxu0 0.0
    %251 = vmatpush1.msra.mxu0 0.0
    %252 = vmatprep.subr.mxu0 0.0
    %253 = vmatpush1.msra.mxu0 0.0
    %254 = vmatprep.subr.mxu0 0.0
    %255 = vmatpush1.msra.mxu0 0.0
    %256 = vmatprep.subr.mxu0 0.0
    %257 = vmatpush1.msra.mxu0 0.0
    %258 = vmatprep.mubr.f32.mxu0 0.0
    %259 = vmatmul.mubr.f32.gmra.mrb[0].mxu0 %v192
    %v260 = vpop.f32.mrb[0].mxu0
    %v261 = vadd.f32 0.0, %v260
    %v262 = vpop.f32.mrb[0].mxu0
    %263 = vdwg.mxu0
    %v264 = vadd.f32 %v187, %v261
    %v265 = vld [vmem:[%s2] sm:$0xff]
    %v266 = vld [vmem:[%s5] sm:$0xf]
    %vm267 = vcmask 31744
    %v269 = vsel %vm267, %v265, 0
    %vm271 = vcmask 1043456
    %v273 = vsel %vm271, %v266, 0
    %275 = vmatprep.subr.mxu0 0.0
    %276 = vmatpush1.msra.mxu0 %v273
    %277 = vmatprep.subr.mxu0 0.0
    %278 = vmatpush1.msra.mxu0 0.0
    %279 = vmatprep.subr.mxu0 0.0
    %280 = vmatpush1.msra.mxu0 0.0
    %281 = vmatprep.subr.mxu0 0.0
    %282 = vmatpush1.msra.mxu0 0.0
    %283 = vmatprep.subr.mxu0 0.0
    %284 = vmatpush1.msra.mxu0 0.0
    %285 = vmatprep.subr.mxu0 0.0
    %286 = vmatpush1.msra.mxu0 0.0
    %287 = vmatprep.subr.mxu0 0.0
    %288 = vmatpush1.msra.mxu0 0.0
    %289 = vmatprep.subr.mxu0 0.0
    %290 = vmatpush1.msra.mxu0 0.0
    %291 = vmatprep.subr.mxu0 0.0
    %292 = vmatpush1.msra.mxu0 0.0
    %293 = vmatprep.subr.mxu0 0.0
    %294 = vmatpush1.msra.mxu0 0.0
    %295 = vmatprep.subr.mxu0 0.0
    %296 = vmatpush1.msra.mxu0 0.0
    %297 = vmatprep.subr.mxu0 0.0
    %298 = vmatpush1.msra.mxu0 0.0
    %299 = vmatprep.subr.mxu0 0.0
    %300 = vmatpush1.msra.mxu0 0.0
    %301 = vmatprep.subr.mxu0 0.0
    %302 = vmatpush1.msra.mxu0 0.0
    %303 = vmatprep.subr.mxu0 0.0
    %304 = vmatpush1.msra.mxu0 0.0
    %305 = vmatprep.subr.mxu0 0.0
    %306 = vmatpush1.msra.mxu0 0.0
    %307 = vmatprep.subr.mxu0 0.0
    %308 = vmatpush1.msra.mxu0 0.0
    %309 = vmatprep.subr.mxu0 0.0
    %310 = vmatpush1.msra.mxu0 0.0
    %311 = vmatprep.subr.mxu0 0.0
    %312 = vmatpush1.msra.mxu0 0.0
    %313 = vmatprep.subr.mxu0 0.0
    %314 = vmatpush1.msra.mxu0 0.0
    %315 = vmatprep.subr.mxu0 0.0
    %316 = vmatpush1.msra.mxu0 0.0
    %317 = vmatprep.subr.mxu0 0.0
    %318 = vmatpush1.msra.mxu0 0.0
    %319 = vmatprep.subr.mxu0 0.0
    %320 = vmatpush1.msra.mxu0 0.0
    %321 = vmatprep.subr.mxu0 0.0
    %322 = vmatpush1.msra.mxu0 0.0
    %323 = vmatprep.subr.mxu0 0.0
    %324 = vmatpush1.msra.mxu0 0.0
    %325 = vmatprep.subr.mxu0 0.0
    %326 = vmatpush1.msra.mxu0 0.0
    %327 = vmatprep.subr.mxu0 0.0
    %328 = vmatpush1.msra.mxu0 0.0
    %329 = vmatprep.subr.mxu0 0.0
    %330 = vmatpush1.msra.mxu0 0.0
    %331 = vmatprep.subr.mxu0 0.0
    %332 = vmatpush1.msra.mxu0 0.0
    %333 = vmatprep.subr.mxu0 0.0
    %334 = vmatpush1.msra.mxu0 0.0
    %335 = vmatprep.subr.mxu0 0.0
    %336 = vmatpush1.msra.mxu0 0.0
    %337 = vmatprep.subr.mxu0 0.0
    %338 = vmatpush1.msra.mxu0 0.0
    %339 = vmatprep.mubr.f32.mxu0 0.0
    %340 = vmatmul.mubr.f32.gmra.mrb[0].mxu0 %v269
    %v341 = vpop.f32.mrb[0].mxu0
    %v342 = vadd.f32 0.0, %v341
    %v343 = vpop.f32.mrb[0].mxu0
    %344 = vdwg.mxu0
    %v345 = vadd.f32 %v264, %v342
    %v346 = vtanh.pop %v345
    %v347 = vld [vmem:[%s8] sm:$0x1]
    %v348 = vld [vmem:[#allocation8] sm:$0xff]
    %v349 = vld [vmem:[#allocation8 + $0x8] sm:$0xff]
    %v350 = vld [vmem:[#allocation8 + $0x10] sm:$0xff]
    %v351 = vld [vmem:[#allocation8 + $0x18] sm:$0xff]
    %v352 = vld [vmem:[#allocation8 + $0x20] sm:$0xff]
    %v353 = vld [vmem:[#allocation8 + $0x28] sm:$0xff]
    %v354 = vld [vmem:[#allocation8 + $0x30] sm:$0xff]
    %v355 = vld [vmem:[#allocation8 + $0x38] sm:$0xff]
    %v356 = vld [vmem:[#allocation8 + $0x40] sm:$0xff]
    %v357 = vld [vmem:[#allocation8 + $0x48] sm:$0xff]
    %v358 = vld [vmem:[#allocation8 + $0x50] sm:$0xff]
    %v359 = vld [vmem:[#allocation8 + $0x58] sm:$0xff]
    %v360 = vld [vmem:[#allocation8 + $0x60] sm:$0xff]
    %v361 = vld [vmem:[#allocation8 + $0x68] sm:$0xff]
    %v362 = vld [vmem:[#allocation8 + $0x70] sm:$0xff]
    %v363 = vld [vmem:[#allocation8 + $0x78] sm:$0xff]
    %364 = vmatprep.subr.mxu0 0.0
    %365 = vmatpush1.msra.mxu0 %v348
    %366 = vmatprep.subr.mxu0 0.0
    %367 = vmatpush1.msra.mxu0 %v349
    %368 = vmatprep.subr.mxu0 0.0
    %369 = vmatpush1.msra.mxu0 %v350
    %370 = vmatprep.subr.mxu0 0.0
    %371 = vmatpush1.msra.mxu0 %v351
    %372 = vmatprep.subr.mxu0 0.0
    %373 = vmatpush1.msra.mxu0 %v352
    %374 = vmatprep.subr.mxu0 0.0
    %375 = vmatpush1.msra.mxu0 %v353
    %376 = vmatprep.subr.mxu0 0.0
    %377 = vmatpush1.msra.mxu0 %v354
    %378 = vmatprep.subr.mxu0 0.0
    %379 = vmatpush1.msra.mxu0 %v355
    %380 = vmatprep.subr.mxu0 0.0
    %381 = vmatpush1.msra.mxu0 %v356
    %382 = vmatprep.subr.mxu0 0.0
    %383 = vmatpush1.msra.mxu0 %v357
    %384 = vmatprep.subr.mxu0 0.0
    %385 = vmatpush1.msra.mxu0 %v358
    %386 = vmatprep.subr.mxu0 0.0
    %387 = vmatpush1.msra.mxu0 %v359
    %388 = vmatprep.subr.mxu0 0.0
    %389 = vmatpush1.msra.mxu0 %v360
    %390 = vmatprep.subr.mxu0 0.0
    %391 = vmatpush1.msra.mxu0 %v361
    %392 = vmatprep.subr.mxu0 0.0
    %393 = vmatpush1.msra.mxu0 %v362
    %394 = vmatprep.subr.mxu0 0.0
    %395 = vmatpush1.msra.mxu0 %v363
    %396 = vmatprep.subr.mxu0 0.0
    %397 = vmatpush1.msra.mxu0 0.0
    %398 = vmatprep.subr.mxu0 0.0
    %399 = vmatpush1.msra.mxu0 0.0
    %400 = vmatprep.subr.mxu0 0.0
    %401 = vmatpush1.msra.mxu0 0.0
    %402 = vmatprep.subr.mxu0 0.0
    %403 = vmatpush1.msra.mxu0 0.0
    %404 = vmatprep.subr.mxu0 0.0
    %405 = vmatpush1.msra.mxu0 0.0
    %406 = vmatprep.subr.mxu0 0.0
    %407 = vmatpush1.msra.mxu0 0.0
    %408 = vmatprep.subr.mxu0 0.0
    %409 = vmatpush1.msra.mxu0 0.0
    %410 = vmatprep.subr.mxu0 0.0
    %411 = vmatpush1.msra.mxu0 0.0
    %412 = vmatprep.subr.mxu0 0.0
    %413 = vmatpush1.msra.mxu0 0.0
    %414 = vmatprep.subr.mxu0 0.0
    %415 = vmatpush1.msra.mxu0 0.0
    %416 = vmatprep.subr.mxu0 0.0
    %417 = vmatpush1.msra.mxu0 0.0
    %418 = vmatprep.subr.mxu0 0.0
    %419 = vmatpush1.msra.mxu0 0.0
    %420 = vmatprep.subr.mxu0 0.0
    %421 = vmatpush1.msra.mxu0 0.0
    %422 = vmatprep.subr.mxu0 0.0
    %423 = vmatpush1.msra.mxu0 0.0
    %424 = vmatprep.subr.mxu0 0.0
    %425 = vmatpush1.msra.mxu0 0.0
    %426 = vmatprep.subr.mxu0 0.0
    %427 = vmatpush1.msra.mxu0 0.0
    %428 = vmatprep.mubr.f32.mxu0 0.0
    %429 = vmatmul.mubr.f32.gmra.mrb[0].mxu0 %v346
    %v430 = vpop.f32.mrb[0].mxu0
    %v431 = vadd.f32 0.0, %v430
    %v432 = vpop.f32.mrb[0].mxu0
    %433 = vdwg.mxu0
    %v435 = vlaneseq
    %v436 = vshrl.u32 %v435, 7
    %v437 = vsub.s32 0, %v436
    %v438 = vrot.slane %v347, %v437
    %v440 = vadd.f32 %v438, %v431
    %v441 = vtanh.pop %v440
    %v442 = vld [vmem:[%s10] sm:$0x1]
    %v443 = vld [vmem:[#allocation10] sm:$0xff]
    %v444 = vld [vmem:[#allocation10 + $0x8] sm:$0xff]
    %v445 = vld [vmem:[#allocation10 + $0x10] sm:$0xff]
    %v446 = vld [vmem:[#allocation10 + $0x18] sm:$0xff]
    %v447 = vld [vmem:[#allocation10 + $0x20] sm:$0xff]
    %v448 = vld [vmem:[#allocation10 + $0x28] sm:$0xff]
    %v449 = vld [vmem:[#allocation10 + $0x30] sm:$0xff]
    %v450 = vld [vmem:[#allocation10 + $0x38] sm:$0xff]
    %v451 = vld [vmem:[#allocation10 + $0x40] sm:$0xff]
    %v452 = vld [vmem:[#allocation10 + $0x48] sm:$0xff]
    %v453 = vld [vmem:[#allocation10 + $0x50] sm:$0xff]
    %v454 = vld [vmem:[#allocation10 + $0x58] sm:$0xff]
    %v455 = vld [vmem:[#allocation10 + $0x60] sm:$0xff]
    %v456 = vld [vmem:[#allocation10 + $0x68] sm:$0xff]
    %v457 = vld [vmem:[#allocation10 + $0x70] sm:$0xff]
    %v458 = vld [vmem:[#allocation10 + $0x78] sm:$0xff]
    %459 = vmatprep.subr.mxu0 0.0
    %460 = vmatpush1.msra.mxu0 %v443
    %461 = vmatprep.subr.mxu0 0.0
    %462 = vmatpush1.msra.mxu0 %v444
    %463 = vmatprep.subr.mxu0 0.0
    %464 = vmatpush1.msra.mxu0 %v445
    %465 = vmatprep.subr.mxu0 0.0
    %466 = vmatpush1.msra.mxu0 %v446
    %467 = vmatprep.subr.mxu0 0.0
    %468 = vmatpush1.msra.mxu0 %v447
    %469 = vmatprep.subr.mxu0 0.0
    %470 = vmatpush1.msra.mxu0 %v448
    %471 = vmatprep.subr.mxu0 0.0
    %472 = vmatpush1.msra.mxu0 %v449
    %473 = vmatprep.subr.mxu0 0.0
    %474 = vmatpush1.msra.mxu0 %v450
    %475 = vmatprep.subr.mxu0 0.0
    %476 = vmatpush1.msra.mxu0 %v451
    %477 = vmatprep.subr.mxu0 0.0
    %478 = vmatpush1.msra.mxu0 %v452
    %479 = vmatprep.subr.mxu0 0.0
    %480 = vmatpush1.msra.mxu0 %v453
    %481 = vmatprep.subr.mxu0 0.0
    %482 = vmatpush1.msra.mxu0 %v454
    %483 = vmatprep.subr.mxu0 0.0
    %484 = vmatpush1.msra.mxu0 %v455
    %485 = vmatprep.subr.mxu0 0.0
    %486 = vmatpush1.msra.mxu0 %v456
    %487 = vmatprep.subr.mxu0 0.0
    %488 = vmatpush1.msra.mxu0 %v457
    %489 = vmatprep.subr.mxu0 0.0
    %490 = vmatpush1.msra.mxu0 %v458
    %491 = vmatprep.subr.mxu0 0.0
    %492 = vmatpush1.msra.mxu0 0.0
    %493 = vmatprep.subr.mxu0 0.0
    %494 = vmatpush1.msra.mxu0 0.0
    %495 = vmatprep.subr.mxu0 0.0
    %496 = vmatpush1.msra.mxu0 0.0
    %497 = vmatprep.subr.mxu0 0.0
    %498 = vmatpush1.msra.mxu0 0.0
    %499 = vmatprep.subr.mxu0 0.0
    %500 = vmatpush1.msra.mxu0 0.0
    %501 = vmatprep.subr.mxu0 0.0
    %502 = vmatpush1.msra.mxu0 0.0
    %503 = vmatprep.subr.mxu0 0.0
    %504 = vmatpush1.msra.mxu0 0.0
    %505 = vmatprep.subr.mxu0 0.0
    %506 = vmatpush1.msra.mxu0 0.0
    %507 = vmatprep.subr.mxu0 0.0
    %508 = vmatpush1.msra.mxu0 0.0
    %509 = vmatprep.subr.mxu0 0.0
    %510 = vmatpush1.msra.mxu0 0.0
    %511 = vmatprep.subr.mxu0 0.0
    %512 = vmatpush1.msra.mxu0 0.0
    %513 = vmatprep.subr.mxu0 0.0
    %514 = vmatpush1.msra.mxu0 0.0
    %515 = vmatprep.subr.mxu0 0.0
    %516 = vmatpush1.msra.mxu0 0.0
    %517 = vmatprep.subr.mxu0 0.0
    %518 = vmatpush1.msra.mxu0 0.0
    %519 = vmatprep.subr.mxu0 0.0
    %520 = vmatpush1.msra.mxu0 0.0
    %521 = vmatprep.subr.mxu0 0.0
    %522 = vmatpush1.msra.mxu0 0.0
    %523 = vmatprep.mubr.f32.mxu0 0.0
    %524 = vmatmul.mubr.f32.gmra.mrb[0].mxu0 %v441
    %v525 = vpop.f32.mrb[0].mxu0
    %v526 = vadd.f32 0.0, %v525
    %v527 = vpop.f32.mrb[0].mxu0
    %528 = vdwg.mxu0
    %v530 = vlaneseq
    %v531 = vshrl.u32 %v530, 7
    %v532 = vsub.s32 0, %v531
    %v533 = vrot.slane %v442, %v532
    %v535 = vadd.f32 %v533, %v526
    %536 = vst [vmem:[#allocation11] sm:$0xff] %v535
    // Predicated region
    $region66: #{tpu_custom_call.1} parent=1 // pred_check
      _
    $region67: #{tpu_custom_call.1} parent=1 // pred_check_branch
      %538 = sbr.rel (0) target = $region69
    $region68: #{tpu_custom_call.1} parent=1 // pred_region
      %s540 = ssub.s32 128, 128
      %541 = vsyncadd [#allocation4], %s540
      %s543 = sshll.u32 [#allocation11], 4
      %s544 = int_to_ptr.vmem [resolvable:$true] %s543
      %546 = dma.vmem_to_hbm [thread:$0]  %s544, 128, %s11, [#allocation4]
    $region69: #{tpu_custom_call.1} parent=1 // pred_fallthru
      _
    // Predicated region
    $region70: #{tpu_custom_call.1} parent=1 // pred_check
      _
    $region71: #{tpu_custom_call.1} parent=1 // pred_check_branch
      %548 = sbr.rel (0) target = $region73
    $region72: #{tpu_custom_call.1} parent=1 // pred_region
      %549 = dma.done [#allocation4], 128
    $region73: #{tpu_custom_call.1} parent=1 // pred_fallthru
      _
    %550 = vsyncpa [#allocation3], 1
    %551 = vsyncpa [#allocation6], 1
    %552 = vsyncpa [#allocation9], 1
    %553 = vsyncpa [#allocation4], 1

</llo_original>
